<compile_context>
chip_gen: v7x
topology: tpu7x:2x2x1
jax: 0.10.0
libtpu: 0.0.40
codegen_flags: <defaults>
</compile_context>

<pallas_src>
import collections
import functools
import math

import jax
import jax.numpy as jnp
from jax import lax
from jax.experimental import pallas as pl
from jax.experimental.pallas import tpu as pltpu


_LOG_SIG_MIN, _LOG_SIG_MAX = -20.0, 2.0
_HALF_LOG_2PI = 0.5 * math.log(2.0 * math.pi)


def _round_up(x, m):
    return ((x + m - 1) // m) * m


# Static layout of the packed parameter slabs (plain python ints -> hashable,
# closed over the kernel via functools.partial).
Layout = collections.namedtuple(
    "Layout",
    ["ctx_dim", "obs_dim", "latent_dim", "act_dim", "h_enc", "h_pol",
     "co_e1", "co_e2", "co_e3", "co_p1o", "co_p1z", "co_p2", "co_ph"])


# --------------------------------------------------------------------------- param packing (once, at init)
def pack_pearl_params(enc_params, pol_params, obs_dim, latent_dim,
                      weight_dtype=jnp.bfloat16):
    """Pack all encoder + policy parameters into two lane-padded slabs.

    Done ONCE at parameter-initialization time (hoisted out of forward):
      * policy W1 is split into obs / z column blocks (cat-free layer 1),
      * mean / log_std heads are merged into one (hidden, 2*act_dim) block,
      * every weight gets a 128-aligned column block in `w_slab` (bf16),
      * the matching bias lives at the same column offset in `b_slab` (f32).
    """
    e1w, e1b, e2w, e2b, e3w, e3b = enc_params
    p1w, p1b, p2w, p2b, pmw, pmb, psw, psb = pol_params

    ctx_dim, h_enc = e1w.shape
    h_pol = p2w.shape[0]
    act_dim = pmw.shape[1]
    assert p1w.shape[0] == obs_dim + latent_dim

    p1w_obs = p1w[:obs_dim, :]
    p1w_z = p1w[obs_dim:, :]
    phw = jnp.concatenate([pmw, psw], axis=1)                      # merged heads
    phb = jnp.concatenate([pmb.reshape(1, -1), psb.reshape(1, -1)], axis=1)

    blocks = [                                    # (weight, bias-or-None)
        (e1w, e1b), (e2w, e2b), (e3w, e3b),
        (p1w_obs, p1b), (p1w_z, None), (p2w, p2b), (phw, phb),
    ]

    col_offsets, off = [], 0
    for w, _ in blocks:
        col_offsets.append(off)
        off += _round_up(int(w.shape[1]), 128)    # 128-lane aligned column blocks
    total_cols = off
    max_rows = _round_up(max(int(w.shape[0]) for w, _ in blocks), 8)

    w_slab = jnp.zeros((max_rows, total_cols), jnp.float32)
    b_slab = jnp.zeros((1, total_cols), jnp.float32)
    for (w, bias), co in zip(blocks, col_offsets):
        fi, fo = int(w.shape[0]), int(w.shape[1])
        w_slab = w_slab.at[:fi, co:co + fo].set(w.astype(jnp.float32))
        if bias is not None:
            b_slab = b_slab.at[:, co:co + fo].set(
                bias.reshape(1, -1).astype(jnp.float32))
    w_slab = w_slab.astype(weight_dtype)          # bf16 weights: half the DMA bytes

    layout = Layout(ctx_dim=ctx_dim, obs_dim=obs_dim, latent_dim=latent_dim,
                    act_dim=act_dim, h_enc=h_enc, h_pol=h_pol,
                    co_e1=col_offsets[0], co_e2=col_offsets[1],
                    co_e3=col_offsets[2], co_p1o=col_offsets[3],
                    co_p1z=col_offsets[4], co_p2=col_offsets[5],
                    co_ph=col_offsets[6])
    return w_slab, b_slab, layout


# --------------------------------------------------------------------------- fused per-task kernel
def _pearl_task_kernel(ctx_ref, obs_ref, eps_post_ref, eps_pol_ref,
                       w_ref, bias_ref, post_ref, pol_ref,
                       *, layout, n_ctx, b, post_pad, pol_pad):
    f32, bf16 = jnp.float32, jnp.bfloat16
    L, A = layout.latent_dim, layout.act_dim
    He, Hp = layout.h_enc, layout.h_pol
    ctx_dim, obs_dim = layout.ctx_dim, layout.obs_dim

    def w_at(co, fi, fo):                          # static slice of bf16 weight slab
        return w_ref[0:fi, co:co + fo]

    def b_at(co, fo):                              # static slice of f32 bias slab
        return bias_ref[0:1, co:co + fo]

    # ---- 1) context encoder MLP for this task: (n_ctx, ctx_dim) -> (n_ctx, 2L) ----
    x = ctx_ref[0].astype(bf16)
    h = jnp.dot(x, w_at(layout.co_e1, ctx_dim, He), preferred_element_type=f32)
    h = jnp.maximum(h + b_at(layout.co_e1, He), 0.0)
    h = jnp.dot(h.astype(bf16), w_at(layout.co_e2, He, He), preferred_element_type=f32)
    h = jnp.maximum(h + b_at(layout.co_e2, He), 0.0)
    params = (jnp.dot(h.astype(bf16), w_at(layout.co_e3, He, 2 * L),
                      preferred_element_type=f32)
              + b_at(layout.co_e3, 2 * L))                          # (n_ctx, 2L) f32

    # ---- 2) product-of-gaussians posterior + rsample z (f32, exact math) ----
    mu = params[:, :L]
    pre = params[:, L:]
    # numerically-stable softplus == F.softplus (threshold branch negligible in f32)
    sigma_sq = jnp.maximum(pre, 0.0) + jnp.log1p(jnp.exp(-jnp.abs(pre)))
    sigma_sq = jnp.maximum(sigma_sq, 1e-7)                          # torch.clamp(min=1e-7)
    inv = 1.0 / sigma_sq                                            # exact reciprocal
    sum_inv = jnp.sum(inv, axis=0, keepdims=True)                   # (1, L)
    z_var = 1.0 / sum_inv                                           # exact (feeds KL term)
    z_mean = z_var * jnp.sum(mu * inv, axis=0, keepdims=True)       # (1, L)
    z_std = lax.rsqrt(sum_inv)                                      # one exact EUP rsqrt
    z = z_mean + z_std * eps_post_ref[0]                            # Normal rsample, (1, L)

    post_parts = [z_mean, z_var, z]
    if post_pad > 3 * L:
        post_parts.append(jnp.zeros((1, post_pad - 3 * L), f32))
    post_ref[0] = jnp.concatenate(post_parts, axis=1)               # lane-dense store

    # ---- 3) tanh-gaussian policy on cat([obs, task_z]) without the concat ----
    obs_x = obs_ref[0].astype(bf16)                                 # (b, obs_dim)
    zh = jnp.dot(z.astype(bf16), w_at(layout.co_p1z, L, Hp),
                 preferred_element_type=f32)                        # (1, Hp)
    h1 = jnp.dot(obs_x, w_at(layout.co_p1o, obs_dim, Hp), preferred_element_type=f32)
    h1 = jnp.maximum(h1 + zh + b_at(layout.co_p1o, Hp), 0.0)        # stride-0 z broadcast
    h2 = jnp.dot(h1.astype(bf16), w_at(layout.co_p2, Hp, Hp), preferred_element_type=f32)
    h2 = jnp.maximum(h2 + b_at(layout.co_p2, Hp), 0.0)
    heads = (jnp.dot(h2.astype(bf16), w_at(layout.co_ph, Hp, 2 * A),
                     preferred_element_type=f32)
             + b_at(layout.co_ph, 2 * A))                           # (b, 2A)

    mean = heads[:, :A]
    log_std = jnp.clip(heads[:, A:], _LOG_SIG_MIN, _LOG_SIG_MAX)
    std = jnp.exp(log_std)
    eps = eps_pol_ref[0]                                            # (b, A)
    pre_tanh = mean + std * eps                                     # TanhNormal.rsample
    action = jnp.tanh(pre_tanh)
    # Normal(mean, std).log_prob(pre_tanh): (pre_tanh - mean)/std == eps exactly
    normal_lp = -0.5 * eps * eps - log_std - _HALF_LOG_2PI
    lp = normal_lp - jnp.log(1.0 - action * action + 1e-6)
    logp = jnp.sum(lp, axis=1, keepdims=True)                       # (b, 1)
    task_z_rows = jnp.broadcast_to(z, (b, L))                       # per-row task_z

    used = 4 * A + 1 + L
    pol_parts = [action, mean, log_std, pre_tanh, logp, task_z_rows]
    if pol_pad > used:
        pol_parts.append(jnp.zeros((b, pol_pad - used), f32))
    pol_ref[0] = jnp.concatenate(pol_parts, axis=1)                 # lane-dense store


# --------------------------------------------------------------------------- forward wrapper
def pearl_agent_forward(obs, context, packed_params, eps_post, eps_pol):
    """Replicates OldPEARLAgent.forward(obs, context) with use_ib=True.

    `packed_params` = pack_pearl_params(...) output, built once at init.
    Returns (policy_outputs, task_z, (z_means, z_vars, z)).
    """
    w_slab, b_slab, layout = packed_params
    t, b, obs_dim = obs.shape
    t_c, n_ctx, ctx_dim = context.shape
    assert t == t_c and obs_dim == layout.obs_dim and ctx_dim == layout.ctx_dim
    L, A = layout.latent_dim, layout.act_dim
    f32 = jnp.float32

    post_pad = _round_up(3 * L, 128)
    pol_pad = _round_up(4 * A + 1 + L, 128)
    eps_post3 = eps_post.reshape(t, 1, L)

    kernel = functools.partial(_pearl_task_kernel, layout=layout, n_ctx=n_ctx,
                               b=b, post_pad=post_pad, pol_pad=pol_pad)

    # rough cost hints so XLA can schedule surrounding ops around the custom call
    flops = 2 * t * (n_ctx * (ctx_dim * layout.h_enc + layout.h_enc * layout.h_enc
                              + layout.h_enc * 2 * L)
                     + L * layout.h_pol
                     + b * (obs_dim * layout.h_pol + layout.h_pol * layout.h_pol
                            + layout.h_pol * 2 * A))
    transcendentals = t * (2 * n_ctx * L + 3 * L + 5 * b * A)
    bytes_accessed = (context.size * 4 + obs.size * 4 + eps_post.size * 4
                      + eps_pol.size * 4
                      + w_slab.size * w_slab.dtype.itemsize + b_slab.size * 4
                      + t * post_pad * 4 + t * b * pol_pad * 4)

    post_slab, pol_slab = pl.pallas_call(
        kernel,
        out_shape=(jax.ShapeDtypeStruct((t, 1, post_pad), f32),
                   jax.ShapeDtypeStruct((t, b, pol_pad), f32)),
        grid=(t,),
        in_specs=[
            pl.BlockSpec((1, n_ctx, ctx_dim), lambda i: (i, 0, 0)),   # context  (per task)
            pl.BlockSpec((1, b, obs_dim), lambda i: (i, 0, 0)),       # obs      (per task)
            pl.BlockSpec((1, 1, L), lambda i: (i, 0, 0)),             # eps_post (per task)
            pl.BlockSpec((1, b, A), lambda i: (i, 0, 0)),             # eps_pol  (per task)
            pl.BlockSpec(w_slab.shape, lambda i: (0, 0)),             # weight slab (resident)
            pl.BlockSpec(b_slab.shape, lambda i: (0, 0)),             # bias slab   (resident)
        ],
        out_specs=(pl.BlockSpec((1, 1, post_pad), lambda i: (i, 0, 0)),
                   pl.BlockSpec((1, b, pol_pad), lambda i: (i, 0, 0))),
        compiler_params=pltpu.CompilerParams(
            dimension_semantics=("parallel",),       # 2x on v7x (2 TCs); pipelined elsewhere
            vmem_limit_bytes=32 * 1024 * 1024),
        cost_estimate=pl.CostEstimate(flops=int(flops),
                                      transcendentals=int(transcendentals),
                                      bytes_accessed=int(bytes_accessed)),
    )(context, obs, eps_post3, eps_pol, w_slab, b_slab)

    post = post_slab[:, 0, :]
    z_means = post[:, :L]
    z_vars = post[:, L:2 * L]
    z = post[:, 2 * L:3 * L]

    pol = pol_slab.reshape(t * b, pol_pad)
    action = pol[:, 0 * A:1 * A]
    mean = pol[:, 1 * A:2 * A]
    log_std = pol[:, 2 * A:3 * A]
    pre_tanh = pol[:, 3 * A:4 * A]
    log_prob = pol[:, 4 * A:4 * A + 1]
    task_z = pol[:, 4 * A + 1:4 * A + 1 + L]        # already broadcast per row in-kernel
    std = jnp.exp(log_std)

    # TanhGaussianPolicy return convention:
    # (action, mean, log_std, log_prob, entropy, std, mean_action_log_prob, pre_tanh)
    policy_outputs = (action, mean, log_std, log_prob, None, std, None, pre_tanh)
    return policy_outputs, task_z, (z_means, z_vars, z)


# --------------------------------------------------------------------------- setup / demo
def _init_linear(key, fan_in, fan_out):
    kw, kb = jax.random.split(key)
    lim = 1.0 / math.sqrt(fan_in)
    w = jax.random.uniform(kw, (fan_in, fan_out), jnp.float32, -lim, lim)
    b = jax.random.uniform(kb, (1, fan_out), jnp.float32, -lim, lim)
    return w, b


if __name__ == "__main__":
    # small shapes consistent with the module
    t, b = 2, 4                       # num_tasks, obs per task
    obs_dim, act_dim = 16, 4
    latent_dim = 8
    n_ctx = 8
    ctx_dim = obs_dim + act_dim + 1   # use_next_obs_in_context=False
    hidden = 32

    key = jax.random.PRNGKey(0)
    keys = jax.random.split(key, 12)

    # context encoder: ctx_dim -> hidden -> hidden -> 2*latent
    e1w, e1b = _init_linear(keys[0], ctx_dim, hidden)
    e2w, e2b = _init_linear(keys[1], hidden, hidden)
    e3w, e3b = _init_linear(keys[2], hidden, 2 * latent_dim)
    enc_params = (e1w, e1b, e2w, e2b, e3w, e3b)

    # policy: (obs_dim + latent) -> hidden -> hidden -> {mean, log_std}
    p1w, p1b = _init_linear(keys[3], obs_dim + latent_dim, hidden)
    p2w, p2b = _init_linear(keys[4], hidden, hidden)
    pmw, pmb = _init_linear(keys[5], hidden, act_dim)
    psw, psb = _init_linear(keys[6], hidden, act_dim)
    pol_params = (p1w, p1b, p2w, p2b, pmw, pmb, psw, psb)

    # pack parameters ONCE (hoisted out of the per-call path)
    packed_params = pack_pearl_params(enc_params, pol_params, obs_dim, latent_dim)

    # inputs
    obs = jax.random.normal(keys[7], (t, b, obs_dim), jnp.float32)
    context = jax.random.normal(keys[8], (t, n_ctx, ctx_dim), jnp.float32)

    # reparameterization noise (host-provided; torch RNG has no in-kernel equivalent)
    eps_post = jax.random.normal(keys[9], (t, latent_dim), jnp.float32)
    eps_pol = jax.random.normal(keys[10], (t, b, act_dim), jnp.float32)

    policy_outputs, task_z, (z_means, z_vars, z) = pearl_agent_forward(
        obs, context, packed_params, eps_post, eps_pol)

    jax.block_until_ready(policy_outputs[0])   # action
    jax.block_until_ready(policy_outputs[3])   # log_prob
    jax.block_until_ready(task_z)
    jax.block_until_ready(z_means)
    jax.block_until_ready(z_vars)

    print("KERNEL_OK")
</pallas_src>

<mosaic_0001>
module attributes {stable_mosaic.version = 11 : i64} {
  func.func @_pearl_task_kernel(%arg0: i32, %arg1: memref<1x8x21xf32, #tpu.memory_space<vmem>>, %arg2: memref<1x4x16xf32, #tpu.memory_space<vmem>>, %arg3: memref<1x1x8xf32, #tpu.memory_space<vmem>>, %arg4: memref<1x4x4xf32, #tpu.memory_space<vmem>>, %arg5: memref<32x896xbf16, #tpu.memory_space<vmem>>, %arg6: memref<1x896xf32, #tpu.memory_space<vmem>>, %arg7: memref<1x1x128xf32, #tpu.memory_space<vmem>>, %arg8: memref<1x4x128xf32, #tpu.memory_space<vmem>>) attributes {dimension_semantics = [#tpu.dimension_semantics<parallel>], iteration_bounds = array<i64: 2>, scalar_prefetch = 0 : i64, scratch_operands = 0 : i64, tpu.core_type = #tpu.core_type<tc>, window_params = [{transform_indices = @transform_0, window_bounds = array<i64: 1, 8, 21>}, {transform_indices = @transform_1, window_bounds = array<i64: 1, 4, 16>}, {transform_indices = @transform_2, window_bounds = array<i64: 1, 1, 8>}, {transform_indices = @transform_3, window_bounds = array<i64: 1, 4, 4>}, {pipeline_mode = #tpu.pipeline_mode<synchronous>, transform_indices = @transform_4, window_bounds = array<i64: 32, 896>}, {pipeline_mode = #tpu.pipeline_mode<synchronous>, transform_indices = @transform_5, window_bounds = array<i64: 1, 896>}, {transform_indices = @transform_6, window_bounds = array<i64: 1, 1, 128>}, {transform_indices = @transform_7, window_bounds = array<i64: 1, 4, 128>}]} {
    %c0 = arith.constant 0 : index
    %c0_0 = arith.constant 0 : index
    %c0_1 = arith.constant 0 : index
    %0 = vector.load %arg1[%c0, %c0_0, %c0_1] : memref<1x8x21xf32, #tpu.memory_space<vmem>>, vector<1x8x21xf32>
    %1 = vector.shape_cast %0 : vector<1x8x21xf32> to vector<8x21xf32>
    %2 = arith.truncf %1 : vector<8x21xf32> to vector<8x21xbf16>
    %c0_2 = arith.constant 0 : index
    %c0_3 = arith.constant 0 : index
    %3 = vector.load %arg5[%c0_2, %c0_3] : memref<32x896xbf16, #tpu.memory_space<vmem>>, vector<21x32xbf16>
    %cst = arith.constant dense<0.000000e+00> : vector<8x32xf32>
    %4 = tpu.matmul %2, %3, %cst {dimension_numbers = #tpu.dot_dimension_numbers<[1], [0], [0], [1], [0, 0, 1, 1], [], []>} : vector<8x21xbf16>, vector<21x32xbf16>, vector<8x32xf32> -> vector<8x32xf32>
    %c0_4 = arith.constant 0 : index
    %c0_5 = arith.constant 0 : index
    %5 = vector.load %arg6[%c0_4, %c0_5] : memref<1x896xf32, #tpu.memory_space<vmem>>, vector<1x32xf32>
    %6 = vector.broadcast %5 : vector<1x32xf32> to vector<8x32xf32>
    %7 = arith.addf %4, %6 : vector<8x32xf32>
    %cst_6 = arith.constant 0.000000e+00 : f32
    %8 = vector.broadcast %cst_6 : f32 to vector<8x32xf32>
    %9 = arith.maximumf %7, %8 : vector<8x32xf32>
    %10 = arith.truncf %9 : vector<8x32xf32> to vector<8x32xbf16>
    %c0_7 = arith.constant 0 : index
    %c128 = arith.constant 128 : index
    %11 = vector.load %arg5[%c0_7, %c128] : memref<32x896xbf16, #tpu.memory_space<vmem>>, vector<32x32xbf16>
    %cst_8 = arith.constant dense<0.000000e+00> : vector<8x32xf32>
    %12 = tpu.matmul %10, %11, %cst_8 {dimension_numbers = #tpu.dot_dimension_numbers<[1], [0], [0], [1], [0, 0, 1, 1], [], []>} : vector<8x32xbf16>, vector<32x32xbf16>, vector<8x32xf32> -> vector<8x32xf32>
    %c0_9 = arith.constant 0 : index
    %c128_10 = arith.constant 128 : index
    %13 = vector.load %arg6[%c0_9, %c128_10] : memref<1x896xf32, #tpu.memory_space<vmem>>, vector<1x32xf32>
    %14 = vector.broadcast %13 : vector<1x32xf32> to vector<8x32xf32>
    %15 = arith.addf %12, %14 : vector<8x32xf32>
    %cst_11 = arith.constant 0.000000e+00 : f32
    %16 = vector.broadcast %cst_11 : f32 to vector<8x32xf32>
    %17 = arith.maximumf %15, %16 : vector<8x32xf32>
    %18 = arith.truncf %17 : vector<8x32xf32> to vector<8x32xbf16>
    %c0_12 = arith.constant 0 : index
    %c256 = arith.constant 256 : index
    %19 = vector.load %arg5[%c0_12, %c256] : memref<32x896xbf16, #tpu.memory_space<vmem>>, vector<32x16xbf16>
    %cst_13 = arith.constant dense<0.000000e+00> : vector<8x16xf32>
    %20 = tpu.matmul %18, %19, %cst_13 {dimension_numbers = #tpu.dot_dimension_numbers<[1], [0], [0], [1], [0, 0, 1, 1], [], []>} : vector<8x32xbf16>, vector<32x16xbf16>, vector<8x16xf32> -> vector<8x16xf32>
    %c0_14 = arith.constant 0 : index
    %c256_15 = arith.constant 256 : index
    %21 = vector.load %arg6[%c0_14, %c256_15] : memref<1x896xf32, #tpu.memory_space<vmem>>, vector<1x16xf32>
    %22 = vector.broadcast %21 : vector<1x16xf32> to vector<8x16xf32>
    %23 = arith.addf %20, %22 : vector<8x16xf32>
    %24 = vector.extract_strided_slice %23 {offsets = [0, 0], sizes = [8, 8], strides = [1, 1]} : vector<8x16xf32> to vector<8x8xf32>
    %25 = vector.extract_strided_slice %23 {offsets = [0, 8], sizes = [8, 8], strides = [1, 1]} : vector<8x16xf32> to vector<8x8xf32>
    %cst_16 = arith.constant 0.000000e+00 : f32
    %26 = vector.broadcast %cst_16 : f32 to vector<8x8xf32>
    %27 = arith.maximumf %25, %26 : vector<8x8xf32>
    %28 = math.absf %25 : vector<8x8xf32>
    %cst_17 = arith.constant 0.000000e+00 : f32
    %29 = vector.broadcast %cst_17 : f32 to vector<8x8xf32>
    %30 = arith.subf %29, %28 : vector<8x8xf32>
    %31 = math.exp %30 : vector<8x8xf32>
    %32 = math.log1p %31 : vector<8x8xf32>
    %33 = arith.addf %27, %32 : vector<8x8xf32>
    %cst_18 = arith.constant 1.000000e-07 : f32
    %34 = vector.broadcast %cst_18 : f32 to vector<8x8xf32>
    %35 = arith.maximumf %33, %34 : vector<8x8xf32>
    %cst_19 = arith.constant 1.000000e+00 : f32
    %36 = vector.broadcast %cst_19 : f32 to vector<8x8xf32>
    %37 = arith.divf %36, %35 : vector<8x8xf32>
    %cst_20 = arith.constant dense<0.000000e+00> : vector<8xf32>
    %38 = vector.multi_reduction <add>, %37, %cst_20 [0] : vector<8x8xf32> to vector<8xf32>
    %39 = vector.shape_cast %38 : vector<8xf32> to vector<1x8xf32>
    %cst_21 = arith.constant 1.000000e+00 : f32
    %40 = vector.broadcast %cst_21 : f32 to vector<1x8xf32>
    %41 = arith.divf %40, %39 : vector<1x8xf32>
    %42 = arith.mulf %24, %37 : vector<8x8xf32>
    %cst_22 = arith.constant dense<0.000000e+00> : vector<8xf32>
    %43 = vector.multi_reduction <add>, %42, %cst_22 [0] : vector<8x8xf32> to vector<8xf32>
    %44 = vector.shape_cast %43 : vector<8xf32> to vector<1x8xf32>
    %45 = arith.mulf %41, %44 : vector<1x8xf32>
    %46 = math.rsqrt %39 : vector<1x8xf32>
    %c0_23 = arith.constant 0 : index
    %c0_24 = arith.constant 0 : index
    %c0_25 = arith.constant 0 : index
    %47 = vector.load %arg3[%c0_23, %c0_24, %c0_25] : memref<1x1x8xf32, #tpu.memory_space<vmem>>, vector<1x1x8xf32>
    %48 = vector.shape_cast %47 : vector<1x1x8xf32> to vector<1x8xf32>
    %49 = arith.mulf %46, %48 : vector<1x8xf32>
    %50 = arith.addf %45, %49 : vector<1x8xf32>
    %cst_26 = arith.constant 0.000000e+00 : f32
    %51 = vector.broadcast %cst_26 : f32 to vector<1x104xf32>
    %52 = tpu.concatenate %45, %41, %50, %51 in 1 : vector<1x8xf32>, vector<1x8xf32>, vector<1x8xf32>, vector<1x104xf32> -> vector<1x128xf32>
    %c0_27 = arith.constant 0 : index
    %c0_28 = arith.constant 0 : index
    %c0_29 = arith.constant 0 : index
    %53 = vector.load %arg7[%c0_27, %c0_28, %c0_29] : memref<1x1x128xf32, #tpu.memory_space<vmem>>, vector<1x1x128xf32>
    %54 = vector.shape_cast %53 : vector<1x1x128xf32> to vector<1x128xf32>
    %55 = vector.shape_cast %52 : vector<1x128xf32> to vector<1x1x128xf32>
    tpu.vector_store %arg7[%c0_27, %c0_28, %c0_29], %55 {strides = array<i32>} : memref<1x1x128xf32, #tpu.memory_space<vmem>>, vector<1x1x128xf32>,
    %c0_30 = arith.constant 0 : index
    %c0_31 = arith.constant 0 : index
    %c0_32 = arith.constant 0 : index
    %56 = vector.load %arg2[%c0_30, %c0_31, %c0_32] : memref<1x4x16xf32, #tpu.memory_space<vmem>>, vector<1x4x16xf32>
    %57 = vector.shape_cast %56 : vector<1x4x16xf32> to vector<4x16xf32>
    %58 = arith.truncf %57 : vector<4x16xf32> to vector<4x16xbf16>
    %59 = arith.truncf %50 : vector<1x8xf32> to vector<1x8xbf16>
    %c0_33 = arith.constant 0 : index
    %c512 = arith.constant 512 : index
    %60 = vector.load %arg5[%c0_33, %c512] : memref<32x896xbf16, #tpu.memory_space<vmem>>, vector<8x32xbf16>
    %cst_34 = arith.constant dense<0.000000e+00> : vector<1x32xf32>
    %61 = tpu.matmul %59, %60, %cst_34 {dimension_numbers = #tpu.dot_dimension_numbers<[1], [0], [0], [1], [0, 0, 1, 1], [], []>} : vector<1x8xbf16>, vector<8x32xbf16>, vector<1x32xf32> -> vector<1x32xf32>
    %c0_35 = arith.constant 0 : index
    %c384 = arith.constant 384 : index
    %62 = vector.load %arg5[%c0_35, %c384] : memref<32x896xbf16, #tpu.memory_space<vmem>>, vector<16x32xbf16>
    %cst_36 = arith.constant dense<0.000000e+00> : vector<4x32xf32>
    %63 = tpu.matmul %58, %62, %cst_36 {dimension_numbers = #tpu.dot_dimension_numbers<[1], [0], [0], [1], [0, 0, 1, 1], [], []>} : vector<4x16xbf16>, vector<16x32xbf16>, vector<4x32xf32> -> vector<4x32xf32>
    %64 = vector.broadcast %61 : vector<1x32xf32> to vector<4x32xf32>
    %65 = arith.addf %63, %64 : vector<4x32xf32>
    %c0_37 = arith.constant 0 : index
    %c384_38 = arith.constant 384 : index
    %66 = vector.load %arg6[%c0_37, %c384_38] : memref<1x896xf32, #tpu.memory_space<vmem>>, vector<1x32xf32>
    %67 = vector.broadcast %66 : vector<1x32xf32> to vector<4x32xf32>
    %68 = arith.addf %65, %67 : vector<4x32xf32>
    %cst_39 = arith.constant 0.000000e+00 : f32
    %69 = vector.broadcast %cst_39 : f32 to vector<4x32xf32>
    %70 = arith.maximumf %68, %69 : vector<4x32xf32>
    %71 = arith.truncf %70 : vector<4x32xf32> to vector<4x32xbf16>
    %c0_40 = arith.constant 0 : index
    %c640 = arith.constant 640 : index
    %72 = vector.load %arg5[%c0_40, %c640] : memref<32x896xbf16, #tpu.memory_space<vmem>>, vector<32x32xbf16>
    %cst_41 = arith.constant dense<0.000000e+00> : vector<4x32xf32>
    %73 = tpu.matmul %71, %72, %cst_41 {dimension_numbers = #tpu.dot_dimension_numbers<[1], [0], [0], [1], [0, 0, 1, 1], [], []>} : vector<4x32xbf16>, vector<32x32xbf16>, vector<4x32xf32> -> vector<4x32xf32>
    %c0_42 = arith.constant 0 : index
    %c640_43 = arith.constant 640 : index
    %74 = vector.load %arg6[%c0_42, %c640_43] : memref<1x896xf32, #tpu.memory_space<vmem>>, vector<1x32xf32>
    %75 = vector.broadcast %74 : vector<1x32xf32> to vector<4x32xf32>
    %76 = arith.addf %73, %75 : vector<4x32xf32>
    %cst_44 = arith.constant 0.000000e+00 : f32
    %77 = vector.broadcast %cst_44 : f32 to vector<4x32xf32>
    %78 = arith.maximumf %76, %77 : vector<4x32xf32>
    %79 = arith.truncf %78 : vector<4x32xf32> to vector<4x32xbf16>
    %c0_45 = arith.constant 0 : index
    %c768 = arith.constant 768 : index
    %80 = vector.load %arg5[%c0_45, %c768] : memref<32x896xbf16, #tpu.memory_space<vmem>>, vector<32x8xbf16>
    %cst_46 = arith.constant dense<0.000000e+00> : vector<4x8xf32>
    %81 = tpu.matmul %79, %80, %cst_46 {dimension_numbers = #tpu.dot_dimension_numbers<[1], [0], [0], [1], [0, 0, 1, 1], [], []>} : vector<4x32xbf16>, vector<32x8xbf16>, vector<4x8xf32> -> vector<4x8xf32>
    %c0_47 = arith.constant 0 : index
    %c768_48 = arith.constant 768 : index
    %82 = vector.load %arg6[%c0_47, %c768_48] : memref<1x896xf32, #tpu.memory_space<vmem>>, vector<1x8xf32>
    %83 = vector.broadcast %82 : vector<1x8xf32> to vector<4x8xf32>
    %84 = arith.addf %81, %83 : vector<4x8xf32>
    %85 = vector.extract_strided_slice %84 {offsets = [0, 0], sizes = [4, 4], strides = [1, 1]} : vector<4x8xf32> to vector<4x4xf32>
    %86 = vector.extract_strided_slice %84 {offsets = [0, 4], sizes = [4, 4], strides = [1, 1]} : vector<4x8xf32> to vector<4x4xf32>
    %cst_49 = arith.constant -2.000000e+01 : f32
    %cst_50 = arith.constant 2.000000e+00 : f32
    %87 = vector.broadcast %cst_49 : f32 to vector<4x4xf32>
    %88 = arith.maximumf %87, %86 : vector<4x4xf32>
    %89 = vector.broadcast %cst_50 : f32 to vector<4x4xf32>
    %90 = arith.minimumf %89, %88 : vector<4x4xf32>
    %91 = math.exp %90 : vector<4x4xf32>
    %c0_51 = arith.constant 0 : index
    %c0_52 = arith.constant 0 : index
    %c0_53 = arith.constant 0 : index
    %92 = vector.load %arg4[%c0_51, %c0_52, %c0_53] : memref<1x4x4xf32, #tpu.memory_space<vmem>>, vector<1x4x4xf32>
    %93 = vector.shape_cast %92 : vector<1x4x4xf32> to vector<4x4xf32>
    %94 = arith.mulf %91, %93 : vector<4x4xf32>
    %95 = arith.addf %85, %94 : vector<4x4xf32>
    %96 = math.tanh %95 : vector<4x4xf32>
    %cst_54 = arith.constant -5.000000e-01 : f32
    %97 = vector.broadcast %cst_54 : f32 to vector<4x4xf32>
    %98 = arith.mulf %97, %93 : vector<4x4xf32>
    %99 = arith.mulf %98, %93 : vector<4x4xf32>
    %100 = arith.subf %99, %90 : vector<4x4xf32>
    %cst_55 = arith.constant 0.918938517 : f32
    %101 = vector.broadcast %cst_55 : f32 to vector<4x4xf32>
    %102 = arith.subf %100, %101 : vector<4x4xf32>
    %103 = arith.mulf %96, %96 : vector<4x4xf32>
    %cst_56 = arith.constant 1.000000e+00 : f32
    %104 = vector.broadcast %cst_56 : f32 to vector<4x4xf32>
    %105 = arith.subf %104, %103 : vector<4x4xf32>
    %cst_57 = arith.constant 9.99999997E-7 : f32
    %106 = vector.broadcast %cst_57 : f32 to vector<4x4xf32>
    %107 = arith.addf %105, %106 : vector<4x4xf32>
    %108 = math.log %107 : vector<4x4xf32>
    %109 = arith.subf %102, %108 : vector<4x4xf32>
    %cst_58 = arith.constant dense<0.000000e+00> : vector<4xf32>
    %110 = vector.multi_reduction <add>, %109, %cst_58 [1] : vector<4x4xf32> to vector<4xf32>
    %111 = vector.shape_cast %110 : vector<4xf32> to vector<4x1xf32>
    %112 = vector.shape_cast %50 : vector<1x8xf32> to vector<1x8xf32>
    %113 = vector.broadcast %112 : vector<1x8xf32> to vector<4x8xf32>
    %cst_59 = arith.constant 0.000000e+00 : f32
    %114 = vector.broadcast %cst_59 : f32 to vector<4x103xf32>
    %115 = tpu.concatenate %96, %85, %90, %95, %111, %113, %114 in 1 : vector<4x4xf32>, vector<4x4xf32>, vector<4x4xf32>, vector<4x4xf32>, vector<4x1xf32>, vector<4x8xf32>, vector<4x103xf32> -> vector<4x128xf32>
    %c0_60 = arith.constant 0 : index
    %c0_61 = arith.constant 0 : index
    %c0_62 = arith.constant 0 : index
    %116 = vector.load %arg8[%c0_60, %c0_61, %c0_62] : memref<1x4x128xf32, #tpu.memory_space<vmem>>, vector<1x4x128xf32>
    %117 = vector.shape_cast %116 : vector<1x4x128xf32> to vector<4x128xf32>
    %118 = vector.shape_cast %115 : vector<4x128xf32> to vector<1x4x128xf32>
    tpu.vector_store %arg8[%c0_60, %c0_61, %c0_62], %118 {strides = array<i32>} : memref<1x4x128xf32, #tpu.memory_space<vmem>>, vector<1x4x128xf32>,
    return
  }
  func.func @transform_0(%arg0: i32) -> (i32, i32, i32) {
    %c0_i32 = arith.constant 0 : i32
    %c0_i32_0 = arith.constant 0 : i32
    %c0_i32_1 = arith.constant 0 : i32
    return %arg0, %c0_i32, %c0_i32_0 : i32, i32, i32
  }
  func.func @transform_1(%arg0: i32) -> (i32, i32, i32) {
    %c0_i32 = arith.constant 0 : i32
    %c0_i32_0 = arith.constant 0 : i32
    %c0_i32_1 = arith.constant 0 : i32
    return %arg0, %c0_i32, %c0_i32_0 : i32, i32, i32
  }
  func.func @transform_2(%arg0: i32) -> (i32, i32, i32) {
    %c0_i32 = arith.constant 0 : i32
    %c0_i32_0 = arith.constant 0 : i32
    %c0_i32_1 = arith.constant 0 : i32
    return %arg0, %c0_i32, %c0_i32_0 : i32, i32, i32
  }
  func.func @transform_3(%arg0: i32) -> (i32, i32, i32) {
    %c0_i32 = arith.constant 0 : i32
    %c0_i32_0 = arith.constant 0 : i32
    %c0_i32_1 = arith.constant 0 : i32
    return %arg0, %c0_i32, %c0_i32_0 : i32, i32, i32
  }
  func.func @transform_4(%arg0: i32) -> (i32, i32) {
    %c0_i32 = arith.constant 0 : i32
    %c0_i32_0 = arith.constant 0 : i32
    %c0_i32_1 = arith.constant 0 : i32
    return %c0_i32, %c0_i32_0 : i32, i32
  }
  func.func @transform_5(%arg0: i32) -> (i32, i32) {
    %c0_i32 = arith.constant 0 : i32
    %c0_i32_0 = arith.constant 0 : i32
    %c0_i32_1 = arith.constant 0 : i32
    return %c0_i32, %c0_i32_0 : i32, i32
  }
  func.func @transform_6(%arg0: i32) -> (i32, i32, i32) {
    %c0_i32 = arith.constant 0 : i32
    %c0_i32_0 = arith.constant 0 : i32
    %c0_i32_1 = arith.constant 0 : i32
    return %arg0, %c0_i32, %c0_i32_0 : i32, i32, i32
  }
  func.func @transform_7(%arg0: i32) -> (i32, i32, i32) {
    %c0_i32 = arith.constant 0 : i32
    %c0_i32_0 = arith.constant 0 : i32
    %c0_i32_1 = arith.constant 0 : i32
    return %arg0, %c0_i32, %c0_i32_0 : i32, i32, i32
  }
}

</mosaic_0001>

<llo_original>
// kernel: tpu_custom_call.1
$region0: #{tpu_custom_call.1}
  #allocation0 [shape = 'u32[]', space=smem, size = 0x4, offset = 0x4, fixed_abs, tag = 'smem constant byte address 0x4 - core index']
  #allocation1 [shape = 'u32[144,128]{1,0:T(1,128)}', space=vmem, size = 0x12000, scoped, tag = 'internal scratch']
  %s0 = inlined_call_operand.hbm [shape: f32[2,8,21], index: 0, kind: input, shape index: {}]
  %s1 = inlined_call_operand.hbm [shape: f32[2,4,16], index: 1, kind: input, shape index: {}]
  %s2 = inlined_call_operand.hbm [shape: f32[2,1,8], index: 2, kind: input, shape index: {}]
  %s3 = inlined_call_operand.vmem [shape: f32[2,4,4], index: 3, kind: input, shape index: {}]
  %s4 = inlined_call_operand.hbm [shape: bf16[32,896], index: 4, kind: input, shape index: {}]
  %s5 = inlined_call_operand.vmem [shape: f32[1,896], index: 5, kind: input, shape index: {}]
  %s6 = inlined_call_operand.hbm [shape: f32[2,1,128], index: 6, kind: output, shape index: {0}]
  %s7 = inlined_call_operand.hbm [shape: f32[2,4,128], index: 7, kind: output, shape index: {1}]
  %8 = xla_tuple %s6, %s7
  %s9 = sld [smem:[#allocation0]]
  $region81: #{tpu_custom_call.1} parent=0
    _
  %s11 = ssub.s32 1, %s9
  %s12 = scalar_select 0, %s11, %s9
  $region1: #{tpu_custom_call.1} parent=0
    #allocation2 [shape = 'u8[8192]{0}', space=vmem, size = 0x2000, scoped, tag = 'input window, operand 0']
    #allocation3 [shape = 's32[2]{0}', space=sflag, size = 0x8, scoped, tag = 'scoped memory for tpu_custom_call.1']
    #allocation4 [shape = 's32[2]{0}', space=sflag, size = 0x8, scoped, tag = 'scoped memory for tpu_custom_call.1']
    #allocation5 [shape = 'u8[4096]{0}', space=vmem, size = 0x1000, scoped, tag = 'input window, operand 1']
    #allocation6 [shape = 's32[2]{0}', space=sflag, size = 0x8, scoped, tag = 'scoped memory for tpu_custom_call.1']
    #allocation7 [shape = 'u8[1024]{0}', space=vmem, size = 0x400, scoped, tag = 'input window, operand 2']
    #allocation8 [shape = 'u8[57344]{0}', space=vmem, size = 0xe000, scoped, tag = 'input window, operand 4, single buffered']
    #allocation9 [shape = 's32[1]{0}', space=sflag, size = 0x4, scoped, tag = 'scoped memory for tpu_custom_call.1']
    #allocation10 [shape = 'u8[1024]{0}', space=vmem, size = 0x400, scoped, tag = 'output window, operand 0']
    #allocation11 [shape = 'u8[4096]{0}', space=vmem, size = 0x1000, scoped, tag = 'output window, operand 1']
    #allocation12 [shape = 's32[2]{0}', space=sflag, size = 0x8, scoped, tag = 'scoped memory for tpu_custom_call.1']
    %13 = vsyncpa [#allocation3], 0
    %s14 = scalar_lea.sflag [#allocation3], 1
    %15 = vsyncpa %s14, 0
    %16 = vsyncpa [#allocation6], 0
    %s17 = scalar_lea.sflag [#allocation6], 1
    %18 = vsyncpa %s17, 0
    %19 = vsyncpa [#allocation9], 0
    %20 = vsyncpa [#allocation4], 0
    %s21 = scalar_lea.sflag [#allocation4], 1
    %22 = vsyncpa %s21, 0
    %23 = vsyncpa [#allocation12], 0
    %s24 = scalar_lea.sflag [#allocation12], 1
    %25 = vsyncpa %s24, 0
    loop: start=0, step=1, limit=4
    $region2: #{tpu_custom_call.1} parent=1 // loop_pre_header
      _
    $region3: #{tpu_custom_call.1} parent=1 // loop_header
      %s27 = sphi 0, %s31
      %p28 = scmp.ge.s32.totalorder %s27, 4
      %s37 = sphi 0, %s39
      %s40 = sphi 0, %s37
      %s41 = sphi 0, %s40
      %s57 = sphi 0, %s41
      %s63 = sphi 0, %s65
      %s66 = sphi 0, %s63
      %s67 = sphi 0, %s66
      %s83 = sphi 0, %s67
      %s89 = sphi 0, %s91
      %s92 = sphi 0, %s89
      %s93 = sphi 0, %s92
      %s109 = sphi 0, %s93
      %s115 = sphi 0, %s117
      %s118 = sphi 0, %s115
      %s119 = sphi 0, %s118
      %s135 = sphi 0, %s119
      %s139 = sphi 0, %s139
      %s141 = sphi 0, %s139
      %s142 = sphi 0, %s141
      %s156 = sphi 0, %s142
      %s160 = sphi 0, %s160
      %s162 = sphi 0, %s160
      %s163 = sphi 0, %s162
      %s177 = sphi 0, %s163
      %s183 = sphi 0, %s185
      %s186 = sphi 0, %s183
      %s187 = sphi 0, %s186
      %s203 = sphi 0, %s187
      %s209 = sphi 0, %s211
      %s212 = sphi 0, %s209
      %s213 = sphi 0, %s212
      %s229 = sphi 0, %s213
    $region4: #{tpu_custom_call.1} parent=1 // loop_header_branch
      %30 = sbr.rel (%p28) target = $region8
    $region5: #{tpu_custom_call.1} parent=1 // loop_body
      %s32 = ssub.s32 %s27, 1
      %s33 = ssub.s32 %s27, 2
      %s34 = sadd.s32 %s27, 1
      %s35 = ssub.s32 %s27, %s34
      %p36 = scmp.eq.s32.totalorder %s35, 0
      %s38 = sadd.s32 %s37, 1
      %s39 = scalar_select %p36, %s37, %s38
      %p42 = pneg %p36
      %p43 = scmp.eq.s32.totalorder %s27, 1
      %p44 = por %p42, %p43
      %p45 = scmp.ne.s32.totalorder %s37, %s40
      %p46 = scmp.eq.s32.totalorder %s27, 0
      %p47 = por %p45, %p46
      %p48 = scmp.ne.s32.totalorder %s37, %s40
      %p49 = scmp.eq.s32.totalorder %s32, 1
      %p50 = por %p48, %p49
      %p51 = scmp.ne.s32.totalorder %s40, %s41
      %p52 = scmp.eq.s32.totalorder %s32, 0
      %p53 = por %p51, %p52
      %p54 = scmp.ne.s32.totalorder %s40, %s41
      %p55 = scmp.eq.s32.totalorder %s33, 1
      %p56 = por %p54, %p55
      %p58 = scmp.ne.s32.totalorder %s41, %s57
      %p59 = scmp.eq.s32.totalorder %s33, 0
      %p60 = por %p58, %p59
      %s61 = ssub.s32 %s27, %s34
      %p62 = scmp.eq.s32.totalorder %s61, 0
      %s64 = sadd.s32 %s63, 1
      %s65 = scalar_select %p62, %s63, %s64
      %p68 = pneg %p62
      %p69 = scmp.eq.s32.totalorder %s27, 1
      %p70 = por %p68, %p69
      %p71 = scmp.ne.s32.totalorder %s63, %s66
      %p72 = scmp.eq.s32.totalorder %s27, 0
      %p73 = por %p71, %p72
      %p74 = scmp.ne.s32.totalorder %s63, %s66
      %p75 = scmp.eq.s32.totalorder %s32, 1
      %p76 = por %p74, %p75
      %p77 = scmp.ne.s32.totalorder %s66, %s67
      %p78 = scmp.eq.s32.totalorder %s32, 0
      %p79 = por %p77, %p78
      %p80 = scmp.ne.s32.totalorder %s66, %s67
      %p81 = scmp.eq.s32.totalorder %s33, 1
      %p82 = por %p80, %p81
      %p84 = scmp.ne.s32.totalorder %s67, %s83
      %p85 = scmp.eq.s32.totalorder %s33, 0
      %p86 = por %p84, %p85
      %s87 = ssub.s32 %s27, %s34
      %p88 = scmp.eq.s32.totalorder %s87, 0
      %s90 = sadd.s32 %s89, 1
      %s91 = scalar_select %p88, %s89, %s90
      %p94 = pneg %p88
      %p95 = scmp.eq.s32.totalorder %s27, 1
      %p96 = por %p94, %p95
      %p97 = scmp.ne.s32.totalorder %s89, %s92
      %p98 = scmp.eq.s32.totalorder %s27, 0
      %p99 = por %p97, %p98
      %p100 = scmp.ne.s32.totalorder %s89, %s92
      %p101 = scmp.eq.s32.totalorder %s32, 1
      %p102 = por %p100, %p101
      %p103 = scmp.ne.s32.totalorder %s92, %s93
      %p104 = scmp.eq.s32.totalorder %s32, 0
      %p105 = por %p103, %p104
      %p106 = scmp.ne.s32.totalorder %s92, %s93
      %p107 = scmp.eq.s32.totalorder %s33, 1
      %p108 = por %p106, %p107
      %p110 = scmp.ne.s32.totalorder %s93, %s109
      %p111 = scmp.eq.s32.totalorder %s33, 0
      %p112 = por %p110, %p111
      %s113 = ssub.s32 %s27, %s34
      %p114 = scmp.eq.s32.totalorder %s113, 0
      %s116 = sadd.s32 %s115, 1
      %s117 = scalar_select %p114, %s115, %s116
      %p120 = pneg %p114
      %p121 = scmp.eq.s32.totalorder %s27, 1
      %p122 = por %p120, %p121
      %p123 = scmp.ne.s32.totalorder %s115, %s118
      %p124 = scmp.eq.s32.totalorder %s27, 0
      %p125 = por %p123, %p124
      %p126 = scmp.ne.s32.totalorder %s115, %s118
      %p127 = scmp.eq.s32.totalorder %s32, 1
      %p128 = por %p126, %p127
      %p129 = scmp.ne.s32.totalorder %s118, %s119
      %p130 = scmp.eq.s32.totalorder %s32, 0
      %p131 = por %p129, %p130
      %p132 = scmp.ne.s32.totalorder %s118, %s119
      %p133 = scmp.eq.s32.totalorder %s33, 1
      %p134 = por %p132, %p133
      %p136 = scmp.ne.s32.totalorder %s119, %s135
      %p137 = scmp.eq.s32.totalorder %s33, 0
      %p138 = por %p136, %p137
      %s140 = sadd.s32 %s139, 1
      %p143 = scmp.eq.s32.totalorder %s27, 1
      %p144 = scmp.ne.s32.totalorder %s139, %s141
      %p145 = scmp.eq.s32.totalorder %s27, 0
      %p146 = por %p144, %p145
      %p147 = scmp.ne.s32.totalorder %s139, %s141
      %p148 = scmp.eq.s32.totalorder %s32, 1
      %p149 = por %p147, %p148
      %p150 = scmp.ne.s32.totalorder %s141, %s142
      %p151 = scmp.eq.s32.totalorder %s32, 0
      %p152 = por %p150, %p151
      %p153 = scmp.ne.s32.totalorder %s141, %s142
      %p154 = scmp.eq.s32.totalorder %s33, 1
      %p155 = por %p153, %p154
      %p157 = scmp.ne.s32.totalorder %s142, %s156
      %p158 = scmp.eq.s32.totalorder %s33, 0
      %p159 = por %p157, %p158
      %s161 = sadd.s32 %s160, 1
      %p164 = scmp.eq.s32.totalorder %s27, 1
      %p165 = scmp.ne.s32.totalorder %s160, %s162
      %p166 = scmp.eq.s32.totalorder %s27, 0
      %p167 = por %p165, %p166
      %p168 = scmp.ne.s32.totalorder %s160, %s162
      %p169 = scmp.eq.s32.totalorder %s32, 1
      %p170 = por %p168, %p169
      %p171 = scmp.ne.s32.totalorder %s162, %s163
      %p172 = scmp.eq.s32.totalorder %s32, 0
      %p173 = por %p171, %p172
      %p174 = scmp.ne.s32.totalorder %s162, %s163
      %p175 = scmp.eq.s32.totalorder %s33, 1
      %p176 = por %p174, %p175
      %p178 = scmp.ne.s32.totalorder %s163, %s177
      %p179 = scmp.eq.s32.totalorder %s33, 0
      %p180 = por %p178, %p179
      %s181 = ssub.s32 %s27, %s34
      %p182 = scmp.eq.s32.totalorder %s181, 0
      %s184 = sadd.s32 %s183, 1
      %s185 = scalar_select %p182, %s183, %s184
      %p188 = pneg %p182
      %p189 = scmp.eq.s32.totalorder %s27, 1
      %p190 = por %p188, %p189
      %p191 = scmp.ne.s32.totalorder %s183, %s186
      %p192 = scmp.eq.s32.totalorder %s27, 0
      %p193 = por %p191, %p192
      %p194 = scmp.ne.s32.totalorder %s183, %s186
      %p195 = scmp.eq.s32.totalorder %s32, 1
      %p196 = por %p194, %p195
      %p197 = scmp.ne.s32.totalorder %s186, %s187
      %p198 = scmp.eq.s32.totalorder %s32, 0
      %p199 = por %p197, %p198
      %p200 = scmp.ne.s32.totalorder %s186, %s187
      %p201 = scmp.eq.s32.totalorder %s33, 1
      %p202 = por %p200, %p201
      %p204 = scmp.ne.s32.totalorder %s187, %s203
      %p205 = scmp.eq.s32.totalorder %s33, 0
      %p206 = por %p204, %p205
      %s207 = ssub.s32 %s27, %s34
      %p208 = scmp.eq.s32.totalorder %s207, 0
      %s210 = sadd.s32 %s209, 1
      %s211 = scalar_select %p208, %s209, %s210
      %p214 = pneg %p208
      %p215 = scmp.eq.s32.totalorder %s27, 1
      %p216 = por %p214, %p215
      %p217 = scmp.ne.s32.totalorder %s209, %s212
      %p218 = scmp.eq.s32.totalorder %s27, 0
      %p219 = por %p217, %p218
      %p220 = scmp.ne.s32.totalorder %s209, %s212
      %p221 = scmp.eq.s32.totalorder %s32, 1
      %p222 = por %p220, %p221
      %p223 = scmp.ne.s32.totalorder %s212, %s213
      %p224 = scmp.eq.s32.totalorder %s32, 0
      %p225 = por %p223, %p224
      %p226 = scmp.ne.s32.totalorder %s212, %s213
      %p227 = scmp.eq.s32.totalorder %s33, 1
      %p228 = por %p226, %p227
      %p230 = scmp.ne.s32.totalorder %s213, %s229
      %p231 = scmp.eq.s32.totalorder %s33, 0
      %p232 = por %p230, %p231
      %p233 = scmp.le.s32.totalorder 1, %s27
      %p234 = scmp.lt.s32.totalorder %s27, 3
      %p235 = pnand %p233, %p234
      %p236 = pneg %p235
      // Predicated region
      $region9: #{tpu_custom_call.1} parent=5 // pred_check
        _
      $region10: #{tpu_custom_call.1} parent=5 // pred_check_branch
        %238 = sbr.rel (%p235) target = $region12
      $region11: #{tpu_custom_call.1} parent=5 // pred_region
        %s239 = ssub.s32 %s27, 1
        // Predicated region
        $region13: #{tpu_custom_call.1} parent=11 // pred_check
          %p240 = pneg %p152
        $region14: #{tpu_custom_call.1} parent=11 // pred_check_branch
          %242 = sbr.rel (%p240) target = $region16
        $region15: #{tpu_custom_call.1} parent=11 // pred_region
          %s244 = ssub.s32 1792, 1792
          %245 = vsyncadd [#allocation9], %s244
          %s246 = sshll.u32 [#allocation8], 4
          %s247 = int_to_ptr.vmem [resolvable:$true] %s246
          %252 = dma.hbm_to_vmem [thread:$0]  %s4, 1792, %s247, [#allocation9], 448, 448, 28
        $region16: #{tpu_custom_call.1} parent=11 // pred_fallthru
          _
        // Predicated region
        $region17: #{tpu_custom_call.1} parent=11 // pred_check
          %p253 = pneg %p173
        $region18: #{tpu_custom_call.1} parent=11 // pred_check_branch
          %255 = sbr.rel (%p253) target = $region20
        $region19: #{tpu_custom_call.1} parent=11 // pred_region
          _
        $region20: #{tpu_custom_call.1} parent=11 // pred_fallthru
          _
      $region12: #{tpu_custom_call.1} parent=5 // pred_fallthru
        _
      %p256 = scmp.lt.s32.totalorder %s27, 2
      // Predicated region
      $region21: #{tpu_custom_call.1} parent=5 // pred_check
        %p257 = pneg %p256
      $region22: #{tpu_custom_call.1} parent=5 // pred_check_branch
        %259 = sbr.rel (%p257) target = $region24
      $region23: #{tpu_custom_call.1} parent=5 // pred_region
        // Predicated region
        $region25: #{tpu_custom_call.1} parent=23 // pred_check
          %p260 = pneg %p47
        $region26: #{tpu_custom_call.1} parent=23 // pred_check_branch
          %262 = sbr.rel (%p260) target = $region28
        $region27: #{tpu_custom_call.1} parent=23 // pred_region
          %s263 = sand.u32 %s37, 1
          %s264 = scalar_lea.sflag [#allocation3], %s263
          %s265 = sand.u32 %s37, 1
          %s266 = smul.addr %s265, 8
          %s267 = scalar_lea.vmem [#allocation2], %s266
          %s269 = ssub.s32 128, 128
          %270 = vsyncadd %s264, %s269
          %s271 = smul.addr %s27, 128
          %s272 = scalar_lea.hbm %s0, %s271
          %s274 = sshll.u32 %s267, 4
          %s275 = int_to_ptr.vmem [resolvable:$true] %s274
          %277 = dma.hbm_to_vmem [thread:$0]  %s272, 128, %s275, %s264
        $region28: #{tpu_custom_call.1} parent=23 // pred_fallthru
          _
        // Predicated region
        $region29: #{tpu_custom_call.1} parent=23 // pred_check
          %p278 = pneg %p73
        $region30: #{tpu_custom_call.1} parent=23 // pred_check_branch
          %280 = sbr.rel (%p278) target = $region32
        $region31: #{tpu_custom_call.1} parent=23 // pred_region
          %s281 = sand.u32 %s27, 1
          %s282 = scalar_lea.sflag [#allocation6], %s281
          %s283 = sand.u32 %s63, 1
          %s284 = smul.addr %s283, 4
          %s285 = scalar_lea.vmem [#allocation5], %s284
          %s287 = ssub.s32 64, 64
          %288 = vsyncadd %s282, %s287
          %s289 = smul.addr %s27, 64
          %s290 = scalar_lea.hbm %s1, %s289
          %s292 = sshll.u32 %s285, 4
          %s293 = int_to_ptr.vmem [resolvable:$true] %s292
          %295 = dma.hbm_to_vmem [thread:$0]  %s290, 64, %s293, %s282
        $region32: #{tpu_custom_call.1} parent=23 // pred_fallthru
          _
        // Predicated region
        $region33: #{tpu_custom_call.1} parent=23 // pred_check
          %p296 = pneg %p99
        $region34: #{tpu_custom_call.1} parent=23 // pred_check_branch
          %298 = sbr.rel (%p296) target = $region36
        $region35: #{tpu_custom_call.1} parent=23 // pred_region
          %s299 = sand.u32 %s27, 1
          %s300 = scalar_lea.sflag [#allocation6], %s299
          %s301 = sand.u32 %s89, 1
          %s302 = scalar_lea.vmem [#allocation7], %s301
          %s304 = ssub.s32 16, 16
          %305 = vsyncadd %s300, %s304
          %s306 = smul.addr %s27, 16
          %s307 = scalar_lea.hbm %s2, %s306
          %s309 = sshll.u32 %s302, 4
          %s310 = int_to_ptr.vmem [resolvable:$true] %s309
          %312 = dma.hbm_to_vmem [thread:$0]  %s307, 16, %s310, %s300
        $region36: #{tpu_custom_call.1} parent=23 // pred_fallthru
          _
        // Predicated region
        $region37: #{tpu_custom_call.1} parent=23 // pred_check
          %p313 = pneg %p125
        $region38: #{tpu_custom_call.1} parent=23 // pred_check_branch
          %315 = sbr.rel (%p313) target = $region40
        $region39: #{tpu_custom_call.1} parent=23 // pred_region
          %p316 = scmp.lt.s32.totalorder %s27, 1
          %s317 = scalar_select %p316, %s27, 1
          %s318 = smul.addr %s317, 4
          %s319 = scalar_lea.vmem %s3, %s318
        $region40: #{tpu_custom_call.1} parent=23 // pred_fallthru
          _
      $region24: #{tpu_custom_call.1} parent=5 // pred_fallthru
        _
      %p320 = scmp.le.s32.totalorder 1, %s27
      %p321 = scmp.lt.s32.totalorder %s27, 3
      %p322 = pnand %p320, %p321
      %p323 = pneg %p322
      // Predicated region
      $region41: #{tpu_custom_call.1} parent=5 // pred_check
        _
      $region42: #{tpu_custom_call.1} parent=5 // pred_check_branch
        %325 = sbr.rel (%p322) target = $region44
      $region43: #{tpu_custom_call.1} parent=5 // pred_region
        %s326 = ssub.s32 %s27, 1
        %s327 = sand.u32 %s40, 1
        %s328 = scalar_lea.sflag [#allocation3], %s327
        %s329 = sand.u32 %s40, 1
        %s330 = smul.addr %s329, 8
        %s331 = scalar_lea.vmem [#allocation2], %s330
        // Predicated region
        $region45: #{tpu_custom_call.1} parent=43 // pred_check
          %p332 = pneg %p53
        $region46: #{tpu_custom_call.1} parent=43 // pred_check_branch
          %334 = sbr.rel (%p332) target = $region48
        $region47: #{tpu_custom_call.1} parent=43 // pred_region
          %335 = dma.done %s328, 128
        $region48: #{tpu_custom_call.1} parent=43 // pred_fallthru
          _
        %s336 = sand.u32 %s32, 1
        %s337 = scalar_lea.sflag [#allocation6], %s336
        %s338 = sand.u32 %s66, 1
        %s339 = smul.addr %s338, 4
        %s340 = scalar_lea.vmem [#allocation5], %s339
        // Predicated region
        $region49: #{tpu_custom_call.1} parent=43 // pred_check
          %p341 = pneg %p79
        $region50: #{tpu_custom_call.1} parent=43 // pred_check_branch
          %343 = sbr.rel (%p341) target = $region52
        $region51: #{tpu_custom_call.1} parent=43 // pred_region
          %344 = dma.done %s337, 64
        $region52: #{tpu_custom_call.1} parent=43 // pred_fallthru
          _
        %s345 = sand.u32 %s32, 1
        %s346 = scalar_lea.sflag [#allocation6], %s345
        %s347 = sand.u32 %s92, 1
        %s348 = scalar_lea.vmem [#allocation7], %s347
        // Predicated region
        $region53: #{tpu_custom_call.1} parent=43 // pred_check
          %p349 = pneg %p105
        $region54: #{tpu_custom_call.1} parent=43 // pred_check_branch
          %351 = sbr.rel (%p349) target = $region56
        $region55: #{tpu_custom_call.1} parent=43 // pred_region
          %352 = dma.done %s346, 16
        $region56: #{tpu_custom_call.1} parent=43 // pred_fallthru
          _
        // Predicated region
        $region57: #{tpu_custom_call.1} parent=43 // pred_check
          %p353 = pneg %p152
        $region58: #{tpu_custom_call.1} parent=43 // pred_check_branch
          %355 = sbr.rel (%p353) target = $region60
        $region59: #{tpu_custom_call.1} parent=43 // pred_region
          %356 = dma.done [#allocation9], 1792
        $region60: #{tpu_custom_call.1} parent=43 // pred_fallthru
          _
        %s357 = sand.u32 %s40, 1
        %s358 = scalar_lea.sflag [#allocation3], %s357
        %s359 = sand.u32 %s40, 1
        %s360 = smul.addr %s359, 8
        %s361 = scalar_lea.vmem [#allocation2], %s360
        %p362 = pneg %p53
        %p363 = pneg %p50
        %s364 = sand.u32 %s32, 1
        %s365 = scalar_lea.sflag [#allocation6], %s364
        %s366 = sand.u32 %s66, 1
        %s367 = smul.addr %s366, 4
        %s368 = scalar_lea.vmem [#allocation5], %s367
        %p369 = pneg %p79
        %p370 = pneg %p76
        %s371 = sand.u32 %s32, 1
        %s372 = scalar_lea.sflag [#allocation6], %s371
        %s373 = sand.u32 %s92, 1
        %s374 = scalar_lea.vmem [#allocation7], %s373
        %p375 = pneg %p105
        %p376 = pneg %p102
        %p377 = scmp.lt.s32.totalorder %s32, 1
        %s378 = scalar_select %p377, %s32, 1
        %s379 = smul.addr %s378, 4
        %s380 = scalar_lea.vmem %s3, %s379
        %p381 = pneg %p131
        %p382 = pneg %p128
        %p383 = pneg %p152
        %p384 = pneg %p149
        %p385 = pneg %p173
        %p386 = pneg %p170
        %p387 = pneg %p199
        %p388 = pneg %p196
        %s389 = sand.u32 %s186, 1
        %s390 = scalar_lea.sflag [#allocation4], %s389
        %s391 = sand.u32 %s186, 1
        %s392 = scalar_lea.vmem [#allocation10], %s391
        %p393 = pneg %p225
        %p394 = pneg %p222
        %s395 = sand.u32 %s212, 1
        %s396 = scalar_lea.sflag [#allocation12], %s395
        %s397 = sand.u32 %s212, 1
        %s398 = smul.addr %s397, 4
        %s399 = scalar_lea.vmem [#allocation11], %s398
        %p400 = scmp.lt.s32.totalorder %s32, 1
        %s401 = scalar_select %p400, %s32, 1
        %s402 = smul.addr %s401, 4
        %s403 = scalar_lea.vmem %s3, %s402
        %v405 = vld [vmem:[%s331] sm:$0xff]
        %v406 = vpack.c.bf16 %v405, %v405
        %v407 = vld [vmem:[#allocation8] sm:$0xf]
        %v408 = vld [vmem:[#allocation8 + $0x1c] sm:$0xf]
        %v409 = vld [vmem:[#allocation8 + $0x38] sm:$0x7]
        %v410 = vld [vmem:[%s5] sm:$0x1]
        %v412 = vlaneseq
        %v413 = vshrl.u32 %v412, 7
        %v414 = vsub.s32 0, %v413
        %v415 = vrot.slane %v410, %v414
        %v420 = vunpack.c.l.b16 %v407
        %v421 = vunpack.c.l.b16 %v408
        %v422 = vunpack.c.l.b16 %v409
        %v423 = vpack.c.b16 %v421, %v420
        %v424 = vpack.c.b16 %v422, %v422
        %vm426 = vcmask 171008
        %v428 = vsel %vm426, %v406, 0
        %vm430 = vcmask 1041408
        %vm431 = vcmask 1042432
        %v432 = vsel %vm430, 4294967295, 65535
        %v433 = vsel %vm431, %v432, 0
        %v435 = vand.u32 %v424, %v433
        %437 = vmatprep.subr.bf16.mxu0 0
        %438 = vmatpush1.bf16.msra.mxu0 %v423
        %439 = vmatprep.subr.bf16.mxu0 0
        %440 = vmatpush1.bf16.msra.mxu0 %v435
        %441 = vmatprep.subr.bf16.mxu0 0
        %442 = vmatpush1.bf16.msra.mxu0 0
        %443 = vmatprep.subr.bf16.mxu0 0
        %444 = vmatpush1.bf16.msra.mxu0 0
        %445 = vmatprep.subr.bf16.mxu0 0
        %446 = vmatpush1.bf16.msra.mxu0 0
        %447 = vmatprep.subr.bf16.mxu0 0
        %448 = vmatpush1.bf16.msra.mxu0 0
        %449 = vmatprep.subr.bf16.mxu0 0
        %450 = vmatpush1.bf16.msra.mxu0 0
        %451 = vmatprep.subr.bf16.mxu0 0
        %452 = vmatpush1.bf16.msra.mxu0 0
        %453 = vmatprep.subr.bf16.mxu0 0
        %454 = vmatpush1.bf16.msra.mxu0 0
        %455 = vmatprep.subr.bf16.mxu0 0
        %456 = vmatpush1.bf16.msra.mxu0 0
        %457 = vmatprep.subr.bf16.mxu0 0
        %458 = vmatpush1.bf16.msra.mxu0 0
        %459 = vmatprep.subr.bf16.mxu0 0
        %460 = vmatpush1.bf16.msra.mxu0 0
        %461 = vmatprep.subr.bf16.mxu0 0
        %462 = vmatpush1.bf16.msra.mxu0 0
        %463 = vmatprep.subr.bf16.mxu0 0
        %464 = vmatpush1.bf16.msra.mxu0 0
        %465 = vmatprep.subr.bf16.mxu0 0
        %466 = vmatpush1.bf16.msra.mxu0 0
        %467 = vmatprep.subr.bf16.mxu0 0
        %468 = vmatpush1.bf16.msra.mxu0 0
        %469 = vmatprep.mubr.bf16.mxu0 0
        %470 = vmatmul.mubr.bf16.gmra.mrb[0].mxu0 %v428
        %v471 = vpop.f32.mrb[0].mxu0
        %v472 = vadd.f32 %v415, %v471
        %v473 = vpop.f32.mrb[0].mxu0
        %v474 = vpop.f32.mrb[0].mxu0
        %v475 = vpop.f32.mrb[0].mxu0
        %476 = vdwg.mxu0
        %v477 = vmax.f32 %v472, 0.0
        %v478 = vpack.c.bf16 %v477, %v477
        %v479 = vld [vmem:[#allocation8 + $0x4] sm:$0xf]
        %v480 = vld [vmem:[#allocation8 + $0x20] sm:$0xf]
        %v481 = vld [vmem:[#allocation8 + $0x3c] sm:$0xf]
        %v482 = vld [vmem:[#allocation8 + $0x58] sm:$0xf]
        %v483 = vld [vmem:[%s5 + $0x1] sm:$0x1]
        %v485 = vlaneseq
        %v486 = vshrl.u32 %v485, 7
        %v487 = vsub.s32 0, %v486
        %v488 = vrot.slane %v483, %v487
        %v494 = vunpack.c.l.b16 %v479
        %v495 = vunpack.c.l.b16 %v480
        %v496 = vunpack.c.l.b16 %v481
        %v497 = vunpack.c.l.b16 %v482
        %v498 = vpack.c.b16 %v495, %v494
        %v499 = vpack.c.b16 %v497, %v496
        %vm502 = vcmask 261120
        %v504 = vsel %vm502, %v478, 0
        %506 = vmatprep.subr.bf16.mxu0 0
        %507 = vmatpush1.bf16.msra.mxu0 %v498
        %508 = vmatprep.subr.bf16.mxu0 0
        %509 = vmatpush1.bf16.msra.mxu0 %v499
        %510 = vmatprep.subr.bf16.mxu0 0
        %511 = vmatpush1.bf16.msra.mxu0 0
        %512 = vmatprep.subr.bf16.mxu0 0
        %513 = vmatpush1.bf16.msra.mxu0 0
        %514 = vmatprep.subr.bf16.mxu0 0
        %515 = vmatpush1.bf16.msra.mxu0 0
        %516 = vmatprep.subr.bf16.mxu0 0
        %517 = vmatpush1.bf16.msra.mxu0 0
        %518 = vmatprep.subr.bf16.mxu0 0
        %519 = vmatpush1.bf16.msra.mxu0 0
        %520 = vmatprep.subr.bf16.mxu0 0
        %521 = vmatpush1.bf16.msra.mxu0 0
        %522 = vmatprep.subr.bf16.mxu0 0
        %523 = vmatpush1.bf16.msra.mxu0 0
        %524 = vmatprep.subr.bf16.mxu0 0
        %525 = vmatpush1.bf16.msra.mxu0 0
        %526 = vmatprep.subr.bf16.mxu0 0
        %527 = vmatpush1.bf16.msra.mxu0 0
        %528 = vmatprep.subr.bf16.mxu0 0
        %529 = vmatpush1.bf16.msra.mxu0 0
        %530 = vmatprep.subr.bf16.mxu0 0
        %531 = vmatpush1.bf16.msra.mxu0 0
        %532 = vmatprep.subr.bf16.mxu0 0
        %533 = vmatpush1.bf16.msra.mxu0 0
        %534 = vmatprep.subr.bf16.mxu0 0
        %535 = vmatpush1.bf16.msra.mxu0 0
        %536 = vmatprep.subr.bf16.mxu0 0
        %537 = vmatpush1.bf16.msra.mxu0 0
        %538 = vmatprep.mubr.bf16.mxu0 0
        %539 = vmatmul.mubr.bf16.gmra.mrb[0].mxu0 %v504
        %v540 = vpop.f32.mrb[0].mxu0
        %v541 = vadd.f32 %v488, %v540
        %v542 = vpop.f32.mrb[0].mxu0
        %v543 = vpop.f32.mrb[0].mxu0
        %v544 = vpop.f32.mrb[0].mxu0
        %545 = vdwg.mxu0
        %v546 = vmax.f32 %v541, 0.0
        %v547 = vpack.c.bf16 %v546, %v546
        %v548 = vld [vmem:[#allocation8 + $0x8] sm:$0xf]
        %v549 = vld [vmem:[#allocation8 + $0x24] sm:$0xf]
        %v550 = vld [vmem:[#allocation8 + $0x40] sm:$0xf]
        %v551 = vld [vmem:[#allocation8 + $0x5c] sm:$0xf]
        %v552 = vld [vmem:[%s5 + $0x2] sm:$0x1]
        %v554 = vlaneseq
        %v555 = vshrl.u32 %v554, 7
        %v556 = vsub.s32 0, %v555
        %v557 = vrot.slane %v552, %v556
        %v563 = vunpack.c.l.b16 %v548
        %v564 = vunpack.c.l.b16 %v549
        %v565 = vunpack.c.l.b16 %v550
        %v566 = vunpack.c.l.b16 %v551
        %v567 = vpack.c.b16 %v564, %v563
        %v568 = vpack.c.b16 %v566, %v565
        %v572 = vsel %vm502, %v547, 0
        %574 = vmatprep.subr.bf16.mxu0 0
        %575 = vmatpush1.bf16.msra.mxu0 %v567
        %576 = vmatprep.subr.bf16.mxu0 0
        %577 = vmatpush1.bf16.msra.mxu0 %v568
        %578 = vmatprep.subr.bf16.mxu0 0
        %579 = vmatpush1.bf16.msra.mxu0 0
        %580 = vmatprep.subr.bf16.mxu0 0
        %581 = vmatpush1.bf16.msra.mxu0 0
        %582 = vmatprep.subr.bf16.mxu0 0
        %583 = vmatpush1.bf16.msra.mxu0 0
        %584 = vmatprep.subr.bf16.mxu0 0
        %585 = vmatpush1.bf16.msra.mxu0 0
        %586 = vmatprep.subr.bf16.mxu0 0
        %587 = vmatpush1.bf16.msra.mxu0 0
        %588 = vmatprep.subr.bf16.mxu0 0
        %589 = vmatpush1.bf16.msra.mxu0 0
        %590 = vmatprep.subr.bf16.mxu0 0
        %591 = vmatpush1.bf16.msra.mxu0 0
        %592 = vmatprep.subr.bf16.mxu0 0
        %593 = vmatpush1.bf16.msra.mxu0 0
        %594 = vmatprep.subr.bf16.mxu0 0
        %595 = vmatpush1.bf16.msra.mxu0 0
        %596 = vmatprep.subr.bf16.mxu0 0
        %597 = vmatpush1.bf16.msra.mxu0 0
        %598 = vmatprep.subr.bf16.mxu0 0
        %599 = vmatpush1.bf16.msra.mxu0 0
        %600 = vmatprep.subr.bf16.mxu0 0
        %601 = vmatpush1.bf16.msra.mxu0 0
        %602 = vmatprep.subr.bf16.mxu0 0
        %603 = vmatpush1.bf16.msra.mxu0 0
        %604 = vmatprep.subr.bf16.mxu0 0
        %605 = vmatpush1.bf16.msra.mxu0 0
        %606 = vmatprep.mubr.bf16.mxu0 0
        %607 = vmatmul.mubr.bf16.gmra.mrb[0].mxu0 %v572
        %v608 = vpop.f32.mrb[0].mxu0
        %v609 = vadd.f32 %v557, %v608
        %v610 = vpop.f32.mrb[0].mxu0
        %v611 = vpop.f32.mrb[0].mxu0
        %v612 = vpop.f32.mrb[0].mxu0
        %613 = vdwg.mxu0
        %v614 = vmax.f32 %v609, 0.0
        %v615 = vand.u32 2147483647, %v609
        %v616 = vsub.f32 0.0, %v615
        %v617 = vmul.f32 %v616, 1.442695
        %v618 = vpow.pop %v617
        %v619 = vadd.f32 %v618, 1.0
        %v620 = vlog2.pop %v619
        %v621 = vmul.f32 %v620, 0.6931472
        %v622 = vmul.f32 -0.5, %v618
        %v623 = vadd.f32 %v622, 1.0
        %v624 = vmul.f32 %v623, %v618
        %v625 = vand.u32 2147483647, %v618
        %vm626 = vcmp.lt.f32.partialorder %v625, 0.0004427343
        %v627 = vsel %vm626, %v624, %v621
        %v628 = vadd.f32 %v614, %v627
        %v629 = vmax.f32 %v628, 1e-07
        %v630 = vrcp.pop %v629
        %v631 = vmul.f32 1.0, %v630
        %vm632 = vcmask 130112
        %v633 = vsel %vm632, %v631, 0.0
        %v634 = vrot.slane %v633, 4
        %v635 = vadd.f32 %v633, %v634
        %v636 = vrot.slane %v635, 2
        %v637 = vadd.f32 %v635, %v636
        %v638 = vrot.slane %v637, 1
        %v639 = vadd.f32 %v637, %v638
        %v640 = vrcp.pop %v639
        %v641 = vmul.f32 1.0, %v640
        %643 = vrot.lane.b32.xlu0 %v631, 120
        %v644 = vpop.permute.xlu0 %643
        %v646 = vmul.f32 %v609, %v644
        %vm647 = vcmask 64512
        %v648 = vsel %vm647, %v646, 0.0
        %v649 = vrot.slane %v648, 4
        %v650 = vadd.f32 %v648, %v649
        %v651 = vrot.slane %v650, 2
        %v652 = vadd.f32 %v650, %v651
        %v653 = vrot.slane %v652, 1
        %v654 = vadd.f32 %v652, %v653
        %656 = vrot.lane.b32.xlu0 %v654, 8
        %v657 = vpop.permute.xlu0 %656
        %v659 = vmul.f32 %v641, %v657
        %v660 = vrsqrt.pop %v639
        %v661 = vld [vmem:[%s348] sm:$0x1]
        %v663 = vlaneseq
        %v664 = vshrl.u32 %v663, 7
        %v665 = vsub.s32 0, %v664
        %v666 = vrot.slane %v661, %v665
        %667 = vrot.lane.b32.xlu0 %v666, 8
        %v668 = vpop.permute.xlu0 %667
        %v670 = vmul.f32 %v660, %v668
        %v671 = vadd.f32 %v659, %v670
        %673 = vrot.lane.b32.xlu0 %v659, 120
        %v674 = vpop.permute.xlu0 %673
        %677 = vrot.lane.b32.xlu0 %v671, 8
        %v678 = vpop.permute.xlu0 %677
        %v680 = vsel %vm647, %v674, %v641
        %vm681 = vcmask 130048
        %v682 = vsel %vm681, %v680, %v678
        %vm683 = vcmask 195584
        %v684 = vsel %vm683, %v682, 0.0
        %685 = vst [vmem:[%s392] sm:$0x1] %v684
        %v686 = vld [vmem:[%s340] sm:$0xf]
        %v687 = vpack.c.bf16 %v686, %v686
        %v688 = vpack.c.bf16 %v671, %v671
        %v689 = vld [vmem:[#allocation8 + $0x10] sm:$0xf]
        %691 = vrot.lane.b32.xlu0 %v688, 120
        %v692 = vpop.permute.xlu0 %691
        %v694 = vsel %vm647, %v692, 0
        %vm696 = vcmask 1043456
        %v698 = vsel %vm696, %v689, 0
        %700 = vmatprep.subr.bf16.mxu0 0
        %701 = vmatpush1.bf16.msra.mxu0 %v698
        %702 = vmatprep.subr.bf16.mxu0 0
        %703 = vmatpush1.bf16.msra.mxu0 0
        %704 = vmatprep.subr.bf16.mxu0 0
        %705 = vmatpush1.bf16.msra.mxu0 0
        %706 = vmatprep.subr.bf16.mxu0 0
        %707 = vmatpush1.bf16.msra.mxu0 0
        %708 = vmatprep.subr.bf16.mxu0 0
        %709 = vmatpush1.bf16.msra.mxu0 0
        %710 = vmatprep.subr.bf16.mxu0 0
        %711 = vmatpush1.bf16.msra.mxu0 0
        %712 = vmatprep.subr.bf16.mxu0 0
        %713 = vmatpush1.bf16.msra.mxu0 0
        %714 = vmatprep.subr.bf16.mxu0 0
        %715 = vmatpush1.bf16.msra.mxu0 0
        %716 = vmatprep.subr.bf16.mxu0 0
        %717 = vmatpush1.bf16.msra.mxu0 0
        %718 = vmatprep.subr.bf16.mxu0 0
        %719 = vmatpush1.bf16.msra.mxu0 0
        %720 = vmatprep.subr.bf16.mxu0 0
        %721 = vmatpush1.bf16.msra.mxu0 0
        %722 = vmatprep.subr.bf16.mxu0 0
        %723 = vmatpush1.bf16.msra.mxu0 0
        %724 = vmatprep.subr.bf16.mxu0 0
        %725 = vmatpush1.bf16.msra.mxu0 0
        %726 = vmatprep.subr.bf16.mxu0 0
        %727 = vmatpush1.bf16.msra.mxu0 0
        %728 = vmatprep.subr.bf16.mxu0 0
        %729 = vmatpush1.bf16.msra.mxu0 0
        %730 = vmatprep.subr.bf16.mxu0 0
        %731 = vmatpush1.bf16.msra.mxu0 0
        %732 = vmatprep.mubr.bf16.mxu0 0
        %733 = vmatmul.mubr.bf16.gmra.mrb[0].mxu0 %v694
        %v734 = vpop.f32.mrb[0].mxu0
        %v735 = vadd.f32 0.0, %v734
        %v736 = vpop.f32.mrb[0].mxu0
        %v737 = vpop.f32.mrb[0].mxu0
        %v738 = vpop.f32.mrb[0].mxu0
        %739 = vdwg.mxu0
        %v740 = vld [vmem:[#allocation8 + $0xc] sm:$0xf]
        %v741 = vld [vmem:[#allocation8 + $0x28] sm:$0xf]
        %v742 = vlaneseq
        %v743 = vshrl.u32 %v742, 7
        %v744 = vsub.s32 0, %v743
        %v745 = vrot.slane %v735, %v744
        %v748 = vunpack.c.l.b16 %v740
        %v749 = vunpack.c.l.b16 %v741
        %v750 = vpack.c.b16 %v749, %v748
        %v753 = vsel %vm681, %v687, 0
        %755 = vmatprep.subr.bf16.mxu0 0
        %756 = vmatpush1.bf16.msra.mxu0 %v750
        %757 = vmatprep.subr.bf16.mxu0 0
        %758 = vmatpush1.bf16.msra.mxu0 0
        %759 = vmatprep.subr.bf16.mxu0 0
        %760 = vmatpush1.bf16.msra.mxu0 0
        %761 = vmatprep.subr.bf16.mxu0 0
        %762 = vmatpush1.bf16.msra.mxu0 0
        %763 = vmatprep.subr.bf16.mxu0 0
        %764 = vmatpush1.bf16.msra.mxu0 0
        %765 = vmatprep.subr.bf16.mxu0 0
        %766 = vmatpush1.bf16.msra.mxu0 0
        %767 = vmatprep.subr.bf16.mxu0 0
        %768 = vmatpush1.bf16.msra.mxu0 0
        %769 = vmatprep.subr.bf16.mxu0 0
        %770 = vmatpush1.bf16.msra.mxu0 0
        %771 = vmatprep.subr.bf16.mxu0 0
        %772 = vmatpush1.bf16.msra.mxu0 0
        %773 = vmatprep.subr.bf16.mxu0 0
        %774 = vmatpush1.bf16.msra.mxu0 0
        %775 = vmatprep.subr.bf16.mxu0 0
        %776 = vmatpush1.bf16.msra.mxu0 0
        %777 = vmatprep.subr.bf16.mxu0 0
        %778 = vmatpush1.bf16.msra.mxu0 0
        %779 = vmatprep.subr.bf16.mxu0 0
        %780 = vmatpush1.bf16.msra.mxu0 0
        %781 = vmatprep.subr.bf16.mxu0 0
        %782 = vmatpush1.bf16.msra.mxu0 0
        %783 = vmatprep.subr.bf16.mxu0 0
        %784 = vmatpush1.bf16.msra.mxu0 0
        %785 = vmatprep.subr.bf16.mxu0 0
        %786 = vmatpush1.bf16.msra.mxu0 0
        %787 = vmatprep.mubr.bf16.mxu0 0
        %788 = vmatmul.mubr.bf16.gmra.mrb[0].mxu0 %v753
        %v789 = vpop.f32.mrb[0].mxu0
        %v790 = vadd.f32 %v745, %v789
        %v791 = vpop.f32.mrb[0].mxu0
        %v792 = vpop.f32.mrb[0].mxu0
        %v793 = vpop.f32.mrb[0].mxu0
        %794 = vdwg.mxu0
        %v795 = vld [vmem:[%s5 + $0x3] sm:$0x1]
        %v797 = vlaneseq
        %v798 = vshrl.u32 %v797, 7
        %v799 = vsub.s32 0, %v798
        %v800 = vrot.slane %v795, %v799
        %v802 = vadd.f32 %v790, %v800
        %v803 = vmax.f32 %v802, 0.0
        %v804 = vpack.c.bf16 %v803, %v803
        %v805 = vld [vmem:[#allocation8 + $0x14] sm:$0xf]
        %v806 = vld [vmem:[#allocation8 + $0x30] sm:$0xf]
        %v807 = vld [vmem:[#allocation8 + $0x4c] sm:$0xf]
        %v808 = vld [vmem:[#allocation8 + $0x68] sm:$0xf]
        %v809 = vld [vmem:[%s5 + $0x5] sm:$0x1]
        %v811 = vlaneseq
        %v812 = vshrl.u32 %v811, 7
        %v813 = vsub.s32 0, %v812
        %v814 = vrot.slane %v809, %v813
        %v820 = vunpack.c.l.b16 %v805
        %v821 = vunpack.c.l.b16 %v806
        %v822 = vunpack.c.l.b16 %v807
        %v823 = vunpack.c.l.b16 %v808
        %v824 = vpack.c.b16 %v821, %v820
        %v825 = vpack.c.b16 %v823, %v822
        %v829 = vsel %vm502, %v804, 0
        %831 = vmatprep.subr.bf16.mxu0 0
        %832 = vmatpush1.bf16.msra.mxu0 %v824
        %833 = vmatprep.subr.bf16.mxu0 0
        %834 = vmatpush1.bf16.msra.mxu0 %v825
        %835 = vmatprep.subr.bf16.mxu0 0
        %836 = vmatpush1.bf16.msra.mxu0 0
        %837 = vmatprep.subr.bf16.mxu0 0
        %838 = vmatpush1.bf16.msra.mxu0 0
        %839 = vmatprep.subr.bf16.mxu0 0
        %840 = vmatpush1.bf16.msra.mxu0 0
        %841 = vmatprep.subr.bf16.mxu0 0
        %842 = vmatpush1.bf16.msra.mxu0 0
        %843 = vmatprep.subr.bf16.mxu0 0
        %844 = vmatpush1.bf16.msra.mxu0 0
        %845 = vmatprep.subr.bf16.mxu0 0
        %846 = vmatpush1.bf16.msra.mxu0 0
        %847 = vmatprep.subr.bf16.mxu0 0
        %848 = vmatpush1.bf16.msra.mxu0 0
        %849 = vmatprep.subr.bf16.mxu0 0
        %850 = vmatpush1.bf16.msra.mxu0 0
        %851 = vmatprep.subr.bf16.mxu0 0
        %852 = vmatpush1.bf16.msra.mxu0 0
        %853 = vmatprep.subr.bf16.mxu0 0
        %854 = vmatpush1.bf16.msra.mxu0 0
        %855 = vmatprep.subr.bf16.mxu0 0
        %856 = vmatpush1.bf16.msra.mxu0 0
        %857 = vmatprep.subr.bf16.mxu0 0
        %858 = vmatpush1.bf16.msra.mxu0 0
        %859 = vmatprep.subr.bf16.mxu0 0
        %860 = vmatpush1.bf16.msra.mxu0 0
        %861 = vmatprep.subr.bf16.mxu0 0
        %862 = vmatpush1.bf16.msra.mxu0 0
        %863 = vmatprep.mubr.bf16.mxu0 0
        %864 = vmatmul.mubr.bf16.gmra.mrb[0].mxu0 %v829
        %v865 = vpop.f32.mrb[0].mxu0
        %v866 = vadd.f32 %v814, %v865
        %v867 = vpop.f32.mrb[0].mxu0
        %v868 = vpop.f32.mrb[0].mxu0
        %v869 = vpop.f32.mrb[0].mxu0
        %870 = vdwg.mxu0
        %v871 = vmax.f32 %v866, 0.0
        %v872 = vpack.c.bf16 %v871, %v871
        %v873 = vld [vmem:[#allocation8 + $0x18] sm:$0xf]
        %v874 = vld [vmem:[#allocation8 + $0x34] sm:$0xf]
        %v875 = vld [vmem:[#allocation8 + $0x50] sm:$0xf]
        %v876 = vld [vmem:[#allocation8 + $0x6c] sm:$0xf]
        %v877 = vld [vmem:[%s5 + $0x6] sm:$0x1]
        %v879 = vlaneseq
        %v880 = vshrl.u32 %v879, 7
        %v881 = vsub.s32 0, %v880
        %v882 = vrot.slane %v877, %v881
        %v888 = vunpack.c.l.b16 %v873
        %v889 = vunpack.c.l.b16 %v874
        %v890 = vunpack.c.l.b16 %v875
        %v891 = vunpack.c.l.b16 %v876
        %v892 = vpack.c.b16 %v889, %v888
        %v893 = vpack.c.b16 %v891, %v890
        %v897 = vsel %vm502, %v872, 0
        %899 = vmatprep.subr.bf16.mxu0 0
        %900 = vmatpush1.bf16.msra.mxu0 %v892
        %901 = vmatprep.subr.bf16.mxu0 0
        %902 = vmatpush1.bf16.msra.mxu0 %v893
        %903 = vmatprep.subr.bf16.mxu0 0
        %904 = vmatpush1.bf16.msra.mxu0 0
        %905 = vmatprep.subr.bf16.mxu0 0
        %906 = vmatpush1.bf16.msra.mxu0 0
        %907 = vmatprep.subr.bf16.mxu0 0
        %908 = vmatpush1.bf16.msra.mxu0 0
        %909 = vmatprep.subr.bf16.mxu0 0
        %910 = vmatpush1.bf16.msra.mxu0 0
        %911 = vmatprep.subr.bf16.mxu0 0
        %912 = vmatpush1.bf16.msra.mxu0 0
        %913 = vmatprep.subr.bf16.mxu0 0
        %914 = vmatpush1.bf16.msra.mxu0 0
        %915 = vmatprep.subr.bf16.mxu0 0
        %916 = vmatpush1.bf16.msra.mxu0 0
        %917 = vmatprep.subr.bf16.mxu0 0
        %918 = vmatpush1.bf16.msra.mxu0 0
        %919 = vmatprep.subr.bf16.mxu0 0
        %920 = vmatpush1.bf16.msra.mxu0 0
        %921 = vmatprep.subr.bf16.mxu0 0
        %922 = vmatpush1.bf16.msra.mxu0 0
        %923 = vmatprep.subr.bf16.mxu0 0
        %924 = vmatpush1.bf16.msra.mxu0 0
        %925 = vmatprep.subr.bf16.mxu0 0
        %926 = vmatpush1.bf16.msra.mxu0 0
        %927 = vmatprep.subr.bf16.mxu0 0
        %928 = vmatpush1.bf16.msra.mxu0 0
        %929 = vmatprep.subr.bf16.mxu0 0
        %930 = vmatpush1.bf16.msra.mxu0 0
        %931 = vmatprep.mubr.bf16.mxu0 0
        %932 = vmatmul.mubr.bf16.gmra.mrb[0].mxu0 %v897
        %v933 = vpop.f32.mrb[0].mxu0
        %v934 = vadd.f32 %v882, %v933
        %v935 = vpop.f32.mrb[0].mxu0
        %v936 = vpop.f32.mrb[0].mxu0
        %v937 = vpop.f32.mrb[0].mxu0
        %938 = vdwg.mxu0
        %v939 = vmax.f32 %v934, -20.0
        %v940 = vmin.f32 %v939, 2.0
        %v941 = vmul.f32 %v940, 1.442695
        %v942 = vpow.pop %v941
        %v943 = vld [vmem:[%s403] sm:$0xf]
        %945 = vrot.lane.b32.xlu0 %v943, 4
        %v946 = vpop.permute.xlu0 %945
        %v948 = vmul.f32 %v942, %v946
        %950 = vrot.lane.b32.xlu0 %v948, 124
        %v951 = vpop.permute.xlu0 %950
        %v953 = vadd.f32 %v934, %v951
        %v954 = vtanh.pop %v953
        %v955 = vmul.f32 %v943, -0.5
        %v956 = vmul.f32 %v955, %v943
        %958 = vrot.lane.b32.xlu0 %v940, 124
        %v959 = vpop.permute.xlu0 %958
        %v961 = vsub.f32 %v956, %v959
        %v962 = vsub.f32 %v961, 0.9189385
        %v963 = vmul.f32 %v954, %v954
        %v964 = vsub.f32 1.0, %v963
        %v965 = vadd.f32 %v964, 1e-06
        %v966 = vlog2.pop %v965
        %v967 = vmul.f32 %v966, 0.6931472
        %v968 = vsub.f32 %v962, %v967
        %vm969 = vcmask 27648
        %v970 = vsel %vm969, %v968, 0.0
        %971 = vadd.xlane.f32.xlu0 %v970
        %v972 = vpop.xlane.xlu0 %971
        %v973 = vlaneseq
        %v974 = vshrl.u32 %v973, 7
        %v975 = vsub.s32 0, %v974
        %v976 = vrot.slane %v671, %v975
        %978 = vrot.lane.b32.xlu0 %v934, 4
        %v979 = vpop.permute.xlu0 %978
        %981 = vrot.lane.b32.xlu0 %v940, 4
        %v982 = vpop.permute.xlu0 %981
        %985 = vrot.lane.b32.xlu0 %v953, 12
        %v986 = vpop.permute.xlu0 %985
        %989 = vrot.lane.b32.xlu0 %v976, 9
        %v990 = vpop.permute.xlu0 %989
        %vm992 = vcmask 31744
        %v993 = vsel %vm992, %v954, %v979
        %v994 = vsel %vm647, %v993, %v982
        %vm995 = vcmask 97280
        %v996 = vsel %vm995, %v994, %v986
        %v997 = vsel %vm681, %v996, %v972
        %vm998 = vcmask 138240
        %v999 = vsel %vm998, %v997, %v990
        %vm1000 = vcmask 203776
        %v1001 = vsel %vm1000, %v999, 0.0
        %1002 = vst [vmem:[%s399] sm:$0xf] %v1001
        %s1003 = sand.u32 %s186, 1
        %s1004 = scalar_lea.sflag [#allocation4], %s1003
        %s1005 = sand.u32 %s186, 1
        %s1006 = scalar_lea.vmem [#allocation10], %s1005
        %s1007 = sand.u32 %s212, 1
        %s1008 = scalar_lea.sflag [#allocation12], %s1007
        %s1009 = sand.u32 %s212, 1
        %s1010 = smul.addr %s1009, 4
        %s1011 = scalar_lea.vmem [#allocation11], %s1010
        // Predicated region
        $region61: #{tpu_custom_call.1} parent=43 // pred_check
          %p1012 = pneg %p196
        $region62: #{tpu_custom_call.1} parent=43 // pred_check_branch
          %1014 = sbr.rel (%p1012) target = $region64
        $region63: #{tpu_custom_call.1} parent=43 // pred_region
          %s1016 = ssub.s32 16, 16
          %1017 = vsyncadd %s1004, %s1016
          %s1018 = smul.addr %s32, 16
          %s1019 = scalar_lea.hbm %s6, %s1018
          %s1021 = sshll.u32 %s1006, 4
          %s1022 = int_to_ptr.vmem [resolvable:$true] %s1021
          %1024 = dma.vmem_to_hbm [thread:$0]  %s1022, 16, %s1019, %s1004
        $region64: #{tpu_custom_call.1} parent=43 // pred_fallthru
          _
        // Predicated region
        $region65: #{tpu_custom_call.1} parent=43 // pred_check
          %p1025 = pneg %p222
        $region66: #{tpu_custom_call.1} parent=43 // pred_check_branch
          %1027 = sbr.rel (%p1025) target = $region68
        $region67: #{tpu_custom_call.1} parent=43 // pred_region
          %s1029 = ssub.s32 64, 64
          %1030 = vsyncadd %s1008, %s1029
          %s1031 = smul.addr %s32, 64
          %s1032 = scalar_lea.hbm %s7, %s1031
          %s1034 = sshll.u32 %s1011, 4
          %s1035 = int_to_ptr.vmem [resolvable:$true] %s1034
          %1037 = dma.vmem_to_hbm [thread:$0]  %s1035, 64, %s1032, %s1008
        $region68: #{tpu_custom_call.1} parent=43 // pred_fallthru
          _
      $region44: #{tpu_custom_call.1} parent=5 // pred_fallthru
        _
      %p1038 = scmp.le.s32.totalorder 2, %s27
      // Predicated region
      $region69: #{tpu_custom_call.1} parent=5 // pred_check
        %p1039 = pneg %p1038
      $region70: #{tpu_custom_call.1} parent=5 // pred_check_branch
        %1041 = sbr.rel (%p1039) target = $region72
      $region71: #{tpu_custom_call.1} parent=5 // pred_region
        %s1042 = ssub.s32 %s27, 2
        // Predicated region
        $region73: #{tpu_custom_call.1} parent=71 // pred_check
          %p1043 = pneg %p202
        $region74: #{tpu_custom_call.1} parent=71 // pred_check_branch
          %1045 = sbr.rel (%p1043) target = $region76
        $region75: #{tpu_custom_call.1} parent=71 // pred_region
          %s1046 = sand.u32 %s187, 1
          %s1047 = scalar_lea.sflag [#allocation4], %s1046
          %s1048 = sand.u32 %s187, 1
          %s1049 = scalar_lea.vmem [#allocation10], %s1048
          %1050 = dma.done %s1047, 16
        $region76: #{tpu_custom_call.1} parent=71 // pred_fallthru
          _
        // Predicated region
        $region77: #{tpu_custom_call.1} parent=71 // pred_check
          %p1051 = pneg %p228
        $region78: #{tpu_custom_call.1} parent=71 // pred_check_branch
          %1053 = sbr.rel (%p1051) target = $region80
        $region79: #{tpu_custom_call.1} parent=71 // pred_region
          %s1054 = sand.u32 %s213, 1
          %s1055 = scalar_lea.sflag [#allocation12], %s1054
          %s1056 = sand.u32 %s213, 1
          %s1057 = smul.addr %s1056, 4
          %s1058 = scalar_lea.vmem [#allocation11], %s1057
          %1059 = dma.done %s1055, 64
        $region80: #{tpu_custom_call.1} parent=71 // pred_fallthru
          _
      $region72: #{tpu_custom_call.1} parent=5 // pred_fallthru
        _
    $region6: #{tpu_custom_call.1} parent=1 // loop_footer
      %s31 = sadd.s32 1, %s27
    $region7: #{tpu_custom_call.1} parent=1 // loop_footer_branch
      %26 = sbr.rel target = $region3
    $region8: #{tpu_custom_call.1} parent=1 // loop_exit
      _
    %1060 = vsyncpa [#allocation3], 1
    %s1061 = scalar_lea.sflag [#allocation3], 1
    %1062 = vsyncpa %s1061, 1
    %1063 = vsyncpa [#allocation6], 1
    %s1064 = scalar_lea.sflag [#allocation6], 1
    %1065 = vsyncpa %s1064, 1
    %1066 = vsyncpa [#allocation9], 1
    %1067 = vsyncpa [#allocation4], 1
    %s1068 = scalar_lea.sflag [#allocation4], 1
    %1069 = vsyncpa %s1068, 1
    %1070 = vsyncpa [#allocation12], 1
    %s1071 = scalar_lea.sflag [#allocation12], 1
    %1072 = vsyncpa %s1071, 1

</llo_original>
